<compile_context>
chip_gen: v6e
topology: v6e:2x2x1
jax: 0.10.0
libtpu: 0.0.40
codegen_flags: <defaults>
</compile_context>

<pallas_src>
import functools
from collections import defaultdict

import jax
import jax.numpy as jnp
from jax import lax
from jax.experimental import pallas as pl
from jax.experimental.pallas import tpu as pltpu

_MXU_DTYPES = {"bfloat16": jnp.bfloat16, "float32": jnp.float32}


def _round_up(n: int, m: int) -> int:
    return ((n + m - 1) // m) * m


def _sublane_multiple(dtype) -> int:
    """Native sublane packing for the factor dtype (f32: 8, bf16: 16, 1B: 32)."""
    return {4: 8, 2: 16, 1: 32}.get(jnp.dtype(dtype).itemsize, 8)


def _vmem_budget_bytes() -> int:
    """Per-generation VMEM budget: half of physical, clamped to [32, 96] MiB.

    v5e/v6e (128 MiB physical) -> 64 MiB; v7x (64 MiB physical) -> 32 MiB.
    """
    try:
        cap = pltpu.get_tpu_info().vmem_capacity_bytes
    except Exception:  # conservative fallback if the query is unavailable
        cap = 128 * 1024 * 1024
    return int(max(32 << 20, min(96 << 20, cap // 2)))


# --------------------------------------------------------------------------- #
# Kernels
# --------------------------------------------------------------------------- #
def _mend_resident_kernel(x_ref, d_ref, w_ref, scale_ref, out_ref, *,
                          tj, ti, mxu_dtype, p_axis):
    """out tile = w tile + dot(-scale * delta, x); factors resident in VMEM.

    x_ref:  (Bp, Ip)  whole padded batch x whole padded in-features (resident)
    d_ref:  (Bp, Jp)  whole padded batch x whole padded out-features (resident)
    w_ref / out_ref: one (tj, ti) weight tile (aliased in HBM)
    scale_ref: (P,) f32 in SMEM = lr_scale * edit_lr per parameter
    """
    if p_axis:
        p, j, i = pl.program_id(0), pl.program_id(1), pl.program_id(2)
    else:
        p, j, i = 0, pl.program_id(0), pl.program_id(1)

    x_t = x_ref[:, pl.ds(pl.multiple_of(i * ti, 128), ti)]
    d_t = d_ref[:, pl.ds(pl.multiple_of(j * tj, 128), tj)]
    # Fold (-scale) into the small (Bp, tj) operand instead of scaling the
    # (tj, ti) grad tile afterwards (~ti/Bp fewer VPU multiplies per tile).
    d_s = (d_t.astype(jnp.float32) * (-scale_ref[p])).astype(mxu_dtype)
    # grad[j, i] = sum_b delta[b, j] * x[b, i]  ==  einsum('bi,bj->ji', x, delta)
    grad = lax.dot_general(
        d_s, x_t.astype(mxu_dtype),
        dimension_numbers=(((0,), (0,)), ((), ())),
        preferred_element_type=jnp.float32,
    )
    out_ref[...] = (w_ref[...].astype(jnp.float32) + grad).astype(out_ref.dtype)


def _mend_chunked_kernel(x_ref, d_ref, w_ref, scale_ref, out_ref, acc_ref, *,
                         mxu_dtype, p_axis):
    """Batch-chunked reduction: grid (..., j, i, b), b innermost / 'arbitrary'.

    x_ref: (tb, ti), d_ref: (tb, tj), w_ref/out_ref: (tj, ti), acc_ref: f32 (tj, ti).
    Used for large edit batches where resident whole-batch factors would not
    fit the per-generation VMEM budget (notably v7x's 64 MiB).
    """
    if p_axis:
        p, b_axis = pl.program_id(0), 3
    else:
        p, b_axis = 0, 2
    b = pl.program_id(b_axis)

    @pl.when(b == 0)
    def _():
        acc_ref[...] = jnp.zeros_like(acc_ref)

    d_s = (d_ref[...].astype(jnp.float32) * (-scale_ref[p])).astype(mxu_dtype)
    acc_ref[...] += lax.dot_general(
        d_s, x_ref[...].astype(mxu_dtype),
        dimension_numbers=(((0,), (0,)), ((), ())),
        preferred_element_type=jnp.float32,
    )

    @pl.when(b == pl.num_programs(b_axis) - 1)
    def _():
        out_ref[...] = (w_ref[...].astype(jnp.float32)
                        + acc_ref[...]).astype(out_ref.dtype)


# --------------------------------------------------------------------------- #
# Padded launcher (jitted, weight donated -> genuinely in-place in HBM)
# --------------------------------------------------------------------------- #
@functools.partial(jax.jit,
                   static_argnames=("tj", "ti", "tb", "mxu_dtype_name", "chunked"),
                   donate_argnums=(2,))
def _mend_update_padded(x, delta, w, scales, *, tj, ti, tb, mxu_dtype_name,
                        chunked):
    """Fused pseudo-grad + in-place weight update on padded, tile-aligned arrays.

    x:      (P, Bp, Ip) or (Bp, Ip)   transformed input factors
    delta:  (P, Bp, Jp) or (Bp, Jp)   transformed grad-output factors
    w:      (P, Jp, Ip) or (Jp, Ip)   weights (donated / aliased to the output)
    scales: (P,) f32 = lr_scale * edit_lr per parameter
    """
    mxu_dtype = _MXU_DTYPES[mxu_dtype_name]
    p_axis = w.ndim == 3
    Bp, Ip = x.shape[-2:]
    Jp = delta.shape[-1]
    nj, ni = Jp // tj, Ip // ti
    P = w.shape[0] if p_axis else 1

    if not chunked:
        kernel = functools.partial(_mend_resident_kernel, tj=tj, ti=ti,
                                   mxu_dtype=mxu_dtype, p_axis=p_axis)
        if p_axis:
            grid = (P, nj, ni)
            in_specs = [
                # x / delta: whole padded rows, resident across the (j, i)
                # sweep for each parameter p (index map ignores j and i).
                pl.BlockSpec((pl.Squeezed(), Bp, Ip), lambda p, j, i: (p, 0, 0)),
                pl.BlockSpec((pl.Squeezed(), Bp, Jp), lambda p, j, i: (p, 0, 0)),
                pl.BlockSpec((pl.Squeezed(), tj, ti), lambda p, j, i: (p, j, i)),
                pl.BlockSpec(memory_space=pltpu.MemorySpace.SMEM),
            ]
            out_spec = pl.BlockSpec((pl.Squeezed(), tj, ti),
                                    lambda p, j, i: (p, j, i))
            sem = ("parallel", "parallel", "parallel")
        else:
            # Singleton group: leading grid axis is j (>= 2 for real T5 dims),
            # so the 2-TC split on v7x still gets a balanced parallel axis.
            grid = (nj, ni)
            in_specs = [
                pl.BlockSpec((Bp, Ip), lambda j, i: (0, 0)),
                pl.BlockSpec((Bp, Jp), lambda j, i: (0, 0)),
                pl.BlockSpec((tj, ti), lambda j, i: (j, i)),
                pl.BlockSpec(memory_space=pltpu.MemorySpace.SMEM),
            ]
            out_spec = pl.BlockSpec((tj, ti), lambda j, i: (j, i))
            sem = ("parallel", "parallel")
        scratch = []
    else:
        nb = Bp // tb
        kernel = functools.partial(_mend_chunked_kernel, mxu_dtype=mxu_dtype,
                                   p_axis=p_axis)
        if p_axis:
            grid = (P, nj, ni, nb)
            in_specs = [
                pl.BlockSpec((pl.Squeezed(), tb, ti), lambda p, j, i, b: (p, b, i)),
                pl.BlockSpec((pl.Squeezed(), tb, tj), lambda p, j, i, b: (p, b, j)),
                pl.BlockSpec((pl.Squeezed(), tj, ti), lambda p, j, i, b: (p, j, i)),
                pl.BlockSpec(memory_space=pltpu.MemorySpace.SMEM),
            ]
            out_spec = pl.BlockSpec((pl.Squeezed(), tj, ti),
                                    lambda p, j, i, b: (p, j, i))
            sem = ("parallel", "parallel", "parallel", "arbitrary")
        else:
            grid = (nj, ni, nb)
            in_specs = [
                pl.BlockSpec((tb, ti), lambda j, i, b: (b, i)),
                pl.BlockSpec((tb, tj), lambda j, i, b: (b, j)),
                pl.BlockSpec((tj, ti), lambda j, i, b: (j, i)),
                pl.BlockSpec(memory_space=pltpu.MemorySpace.SMEM),
            ]
            out_spec = pl.BlockSpec((tj, ti), lambda j, i, b: (j, i))
            sem = ("parallel", "parallel", "arbitrary")
        scratch = [pltpu.VMEM((tj, ti), jnp.float32)]

    return pl.pallas_call(
        kernel,
        out_shape=jax.ShapeDtypeStruct(w.shape, w.dtype),
        grid_spec=pltpu.PrefetchScalarGridSpec(
            num_scalar_prefetch=0,
            grid=grid,
            in_specs=in_specs,
            out_specs=out_spec,
            scratch_shapes=scratch,
        ),
        input_output_aliases={2: 0},   # new weights overwrite the weight buffer
        compiler_params=pltpu.CompilerParams(
            dimension_semantics=sem,
            vmem_limit_bytes=_vmem_budget_bytes(),
        ),
    )(x, delta, w, scales)


# --------------------------------------------------------------------------- #
# Shape-group wrapper: padding + path selection
# --------------------------------------------------------------------------- #
def _mend_group_update(x, delta, w, scales, *, tj=256, ti=512, tb=512,
                       mxu_dtype="bfloat16", force_chunked=None):
    """Pad one shape-group to tile-friendly sizes and run the fused kernel.

    x: (..., B, I), delta: (..., B, J), w: (..., J, I); an optional leading P
    axis stacks parameters that share a shape (MEND shared=True grouping).
    """
    p_axis = w.ndim == 3
    assert x.ndim == w.ndim and delta.ndim == w.ndim
    B, I = x.shape[-2:]
    J = delta.shape[-1]
    assert w.shape[-2:] == (J, I) and delta.shape[-2] == B
    if p_axis:
        P = w.shape[0]
        assert x.shape[0] == P and delta.shape[0] == P and scales.shape == (P,)
    else:
        assert scales.shape == (1,)

    # Lane dims pad to multiples of 128; the batch (contraction) dim pads to
    # the factor dtype's native sublane packing (8 f32 / 16 bf16 / 32 int8) so
    # DMAs stay unmasked and the MXU K dim is fully packed.
    sub = _sublane_multiple(x.dtype)
    Bp = _round_up(B, sub)
    Jp = _round_up(J, 128)
    Ip = _round_up(I, 128)
    tje = min(tj, Jp)
    Jp = _round_up(Jp, tje)
    tie = min(ti, Ip)
    Ip = _round_up(Ip, tie)
    # TODO(synk): on v5e, drop tje to 128 if bundle dumps show the (256, 512)
    # f32 grad intermediate spilling the 64-entry vreg file.

    # Resident-factor path keeps x / delta in VMEM for the whole (j, i) sweep;
    # fall back to the batch-chunked reduction axis when that would blow the
    # per-generation VMEM budget (large edit batches), which bounds the factor
    # blocks to (tb, ti) / (tb, tj) regardless of B.
    fbytes = jnp.dtype(x.dtype).itemsize
    wbytes = jnp.dtype(w.dtype).itemsize
    resident_bytes = (2 * Bp * (Ip + Jp) * fbytes    # double-buffered factors
                      + 4 * tje * tie * wbytes       # w tile + out tile, 2-deep
                      + 2 * tje * tie * 4)           # f32 grad / epilogue slack
    chunked = resident_bytes > int(0.75 * _vmem_budget_bytes())
    if force_chunked is not None:
        chunked = bool(force_chunked)

    if chunked:
        tbe = min(_round_up(tb, sub), Bp)
        Bp = _round_up(Bp, tbe)
    else:
        tbe = Bp

    pad_b, pad_i, pad_j = Bp - B, Ip - I, Jp - J
    lead = ((0, 0),) if p_axis else ()
    if pad_b or pad_i:
        x = jnp.pad(x, lead + ((0, pad_b), (0, pad_i)))
    if pad_b or pad_j:
        delta = jnp.pad(delta, lead + ((0, pad_b), (0, pad_j)))
    if pad_j or pad_i:
        w = jnp.pad(w, lead + ((0, pad_j), (0, pad_i)))

    new_w = _mend_update_padded(x, delta, w, scales, tj=tje, ti=tie, tb=tbe,
                                mxu_dtype_name=mxu_dtype, chunked=chunked)

    if pad_j or pad_i:
        new_w = new_w[..., :J, :I]
    return new_w


def mend_apply_edits(params, factors, edit_lrs, lr_scale=1.0, *,
                     factor_mxu_dtype="bfloat16"):
    """Mirror of Mend.edit()'s parameter-update loop.

    params:   {name: weight (out_features, in_features)}  (nn.Linear layout)
    factors:  {name: (x (B, in_features), delta (B, out_features))} -- the
              GradientTransform outputs.
    edit_lrs: per-parameter learned learning rates (nn.Parameter([edit_lr]*N)).
    factor_mxu_dtype: 'bfloat16' feeds the MXU bf16 factors (one MXU pass,
              halved factor VMEM/DMA) -- the usual MEND pseudo-grad precision
              tradeoff; pass 'float32' for exact-f32 pseudo-grads.

    Parameters sharing weight shape/dtype AND factor shapes/dtypes (MEND's
    shared=True grouping) are stacked and updated by ONE pallas_call; singleton
    groups skip the stack/unstack copies entirely and donate the 2-D weight.
    """
    names = list(params.keys())
    lr_by_name = dict(zip(names, edit_lrs))

    groups = defaultdict(list)
    for name in names:
        w = params[name]
        x, d = factors[name]
        key = (tuple(w.shape), jnp.dtype(w.dtype).name,
               tuple(x.shape), jnp.dtype(x.dtype).name,
               tuple(d.shape), jnp.dtype(d.dtype).name)
        groups[key].append(name)

    new_params = {}
    for gnames in groups.values():
        scales = jnp.asarray([lr_scale * float(lr_by_name[n]) for n in gnames],
                             dtype=jnp.float32)
        if len(gnames) == 1:
            n = gnames[0]
            new_params[n] = _mend_group_update(
                factors[n][0], factors[n][1], params[n], scales,
                mxu_dtype=factor_mxu_dtype)
        else:
            # TODO(synk): in a real multi-step edit loop, keep this stacked
            # weight buffer persistent across edit steps (stack once, unstack
            # once at the end) instead of paying stack/unstack copies per call.
            w_s = jnp.stack([params[n] for n in gnames])
            x_s = jnp.stack([factors[n][0] for n in gnames])
            d_s = jnp.stack([factors[n][1] for n in gnames])
            new_w = _mend_group_update(x_s, d_s, w_s, scales,
                                       mxu_dtype=factor_mxu_dtype)
            for k, n in enumerate(gnames):
                new_params[n] = new_w[k]
    return new_params


if __name__ == "__main__":
    # TODO(synk): Mend.forward()/edit() also invoke the full T5 base model,
    # masked_log_probs loss, autograd backward, `higher` monkeypatching and the
    # GradientTransform MLP; those have no single-kernel Pallas equivalent —
    # only the pseudo-gradient + in-place parameter update hot path is fused.
    key = jax.random.PRNGKey(0)
    B = 6               # small edit batch (exercises dtype-aware batch padding)
    lr_scale = 1.0

    # (name, (out_features, in_features), dtype) — grouped by shape (shared=True)
    param_defs = [
        ("enc.block0.wi", (256, 128), jnp.float32),
        ("enc.block1.wi", (256, 128), jnp.float32),   # same shape -> one fused call
        ("dec.block0.wo", (100, 320), jnp.float32),   # exercises J/I padding path
        ("lm_head",       (128, 256), jnp.bfloat16),  # exercises bf16 weights/factors
    ]
    edit_lrs = [1e-4, 2e-4, 3e-4, 4e-4]               # per-parameter learned lrs

    params, factors = {}, {}
    for idx, (name, (out_f, in_f), dt) in enumerate(param_defs):
        kw, kx, kd = jax.random.split(jax.random.fold_in(key, idx), 3)
        params[name] = (jax.random.normal(kw, (out_f, in_f), jnp.float32)
                        * 0.02).astype(dt)
        factors[name] = (
            jax.random.normal(kx, (B, in_f), jnp.float32).astype(dt),   # x
            jax.random.normal(kd, (B, out_f), jnp.float32).astype(dt),  # delta
        )

    # References (plain-JAX semantics of Mend.edit()) computed BEFORE the
    # kernel: the kernel donates / aliases weight buffers (in_place edit),
    # so the original weights must not be read afterwards.
    refs, orig_meta = {}, {}
    for (name, _, _), lr in zip(param_defs, edit_lrs):
        x, delta = factors[name]
        grad = jnp.einsum("bi,bj->ji",
                          x.astype(jnp.float32), delta.astype(jnp.float32),
                          precision=lax.Precision.HIGHEST)
        refs[name] = params[name].astype(jnp.float32) - lr_scale * lr * grad
        orig_meta[name] = (params[name].shape, params[name].dtype)
    jax.block_until_ready(refs)

    new_params = mend_apply_edits(params, factors, edit_lrs, lr_scale)
    jax.block_until_ready(new_params)

    ok = True
    for (name, _, dt) in param_defs:
        got = new_params[name]
        shape0, dtype0 = orig_meta[name]
        tol = 2e-4 if dt == jnp.float32 else 1e-2
        ok &= got.shape == shape0
        ok &= got.dtype == dtype0
        ok &= bool(jnp.allclose(got.astype(jnp.float32), refs[name],
                                atol=tol, rtol=tol))

    # Extra coverage: force the batch-chunked reduction path (stands in for a
    # large edit batch that would not fit resident factors in VMEM).
    kx, kd, kw2 = jax.random.split(jax.random.fold_in(key, 100), 3)
    Bc, Jc, Ic = 24, 256, 384
    xc = jax.random.normal(kx, (Bc, Ic), jnp.float32)
    dc = jax.random.normal(kd, (Bc, Jc), jnp.float32)
    wc = jax.random.normal(kw2, (Jc, Ic), jnp.float32) * 0.02
    ref_c = wc - 3e-4 * jnp.einsum("bi,bj->ji", xc, dc,
                                   precision=lax.Precision.HIGHEST)
    jax.block_until_ready(ref_c)
    got_c = _mend_group_update(xc, dc, wc, jnp.asarray([3e-4], jnp.float32),
                               tb=8, force_chunked=True)
    jax.block_until_ready(got_c)
    ok &= bool(jnp.allclose(got_c, ref_c, atol=3e-4, rtol=3e-4))

    print("KERNEL_OK" if ok else "KERNEL_MISMATCH")
</pallas_src>

<mosaic_0001>
module attributes {stable_mosaic.version = 11 : i64} {
  func.func @_mend_resident_kernel(%arg0: i32, %arg1: i32, %arg2: i32, %arg3: memref<1x8x128xf32, #tpu.memory_space<vmem>>, %arg4: memref<1x8x256xf32, #tpu.memory_space<vmem>>, %arg5: memref<1x256x128xf32, #tpu.memory_space<vmem>>, %arg6: memref<2xf32, #tpu.memory_space<smem>>, %arg7: memref<1x256x128xf32, #tpu.memory_space<vmem>>) attributes {dimension_semantics = [#tpu.dimension_semantics<parallel>, #tpu.dimension_semantics<parallel>, #tpu.dimension_semantics<parallel>], iteration_bounds = array<i64: 2, 1, 1>, scalar_prefetch = 0 : i64, scratch_operands = 0 : i64, tpu.core_type = #tpu.core_type<tc>, window_params = [{transform_indices = @transform_0, window_bounds = array<i64: 1, 8, 128>}, {transform_indices = @transform_1, window_bounds = array<i64: 1, 8, 256>}, {transform_indices = @transform_2, window_bounds = array<i64: 1, 256, 128>}, {transform_indices = @transform_3, window_bounds = array<i64: 2>}, {transform_indices = @transform_4, window_bounds = array<i64: 1, 256, 128>}]} {
    %c128_i32 = arith.constant 128 : i32
    %0 = arith.muli %arg2, %c128_i32 : i32
    %1 = tpu.assume_multiple %0, 128 : i32
    %c0 = arith.constant 0 : index
    %c0_0 = arith.constant 0 : index
    %2 = arith.index_cast %1 : i32 to index
    %3 = vector.load %arg3[%c0, %c0_0, %2] : memref<1x8x128xf32, #tpu.memory_space<vmem>>, vector<1x8x128xf32>
    %4 = vector.shape_cast %3 : vector<1x8x128xf32> to vector<8x128xf32>
    %c256_i32 = arith.constant 256 : i32
    %5 = arith.muli %arg1, %c256_i32 : i32
    %6 = tpu.assume_multiple %5, 128 : i32
    %c0_1 = arith.constant 0 : index
    %c0_2 = arith.constant 0 : index
    %7 = arith.index_cast %6 : i32 to index
    %8 = vector.load %arg4[%c0_1, %c0_2, %7] : memref<1x8x256xf32, #tpu.memory_space<vmem>>, vector<1x8x256xf32>
    %9 = vector.shape_cast %8 : vector<1x8x256xf32> to vector<8x256xf32>
    %10 = arith.index_cast %arg0 : i32 to index
    %11 = memref.load %arg6[%10] : memref<2xf32, #tpu.memory_space<smem>>
    %cst = arith.constant 0.000000e+00 : f32
    %12 = arith.subf %cst, %11 : f32
    %13 = vector.broadcast %12 : f32 to vector<8x256xf32>
    %14 = arith.mulf %9, %13 : vector<8x256xf32>
    %15 = arith.truncf %14 : vector<8x256xf32> to vector<8x256xbf16>
    %16 = arith.truncf %4 : vector<8x128xf32> to vector<8x128xbf16>
    %cst_3 = arith.constant dense<0.000000e+00> : vector<256x128xf32>
    %17 = tpu.matmul %15, %16, %cst_3 {dimension_numbers = #tpu.dot_dimension_numbers<[0], [0], [1], [1], [0, 1, 1, 1], [], []>} : vector<8x256xbf16>, vector<8x128xbf16>, vector<256x128xf32> -> vector<256x128xf32>
    %c0_4 = arith.constant 0 : index
    %c0_5 = arith.constant 0 : index
    %c0_6 = arith.constant 0 : index
    %18 = vector.load %arg5[%c0_4, %c0_5, %c0_6] : memref<1x256x128xf32, #tpu.memory_space<vmem>>, vector<1x256x128xf32>
    %19 = vector.shape_cast %18 : vector<1x256x128xf32> to vector<256x128xf32>
    %20 = arith.addf %19, %17 : vector<256x128xf32>
    %c0_7 = arith.constant 0 : index
    %c0_8 = arith.constant 0 : index
    %c0_9 = arith.constant 0 : index
    %21 = vector.load %arg7[%c0_7, %c0_8, %c0_9] : memref<1x256x128xf32, #tpu.memory_space<vmem>>, vector<1x256x128xf32>
    %22 = vector.shape_cast %21 : vector<1x256x128xf32> to vector<256x128xf32>
    %23 = vector.shape_cast %20 : vector<256x128xf32> to vector<1x256x128xf32>
    tpu.vector_store %arg7[%c0_7, %c0_8, %c0_9], %23 {strides = array<i32>} : memref<1x256x128xf32, #tpu.memory_space<vmem>>, vector<1x256x128xf32>,
    return
  }
  func.func @transform_0(%arg0: i32, %arg1: i32, %arg2: i32) -> (i32, i32, i32) {
    %c0_i32 = arith.constant 0 : i32
    %c0_i32_0 = arith.constant 0 : i32
    %c0_i32_1 = arith.constant 0 : i32
    return %arg0, %c0_i32, %c0_i32_0 : i32, i32, i32
  }
  func.func @transform_1(%arg0: i32, %arg1: i32, %arg2: i32) -> (i32, i32, i32) {
    %c0_i32 = arith.constant 0 : i32
    %c0_i32_0 = arith.constant 0 : i32
    %c0_i32_1 = arith.constant 0 : i32
    return %arg0, %c0_i32, %c0_i32_0 : i32, i32, i32
  }
  func.func @transform_2(%arg0: i32, %arg1: i32, %arg2: i32) -> (i32, i32, i32) {
    %c0_i32 = arith.constant 0 : i32
    return %arg0, %arg1, %arg2 : i32, i32, i32
  }
  func.func @transform_3(%arg0: i32, %arg1: i32, %arg2: i32) -> i32 {
    %c0_i32 = arith.constant 0 : i32
    %c0_i32_0 = arith.constant 0 : i32
    return %c0_i32 : i32
  }
  func.func @transform_4(%arg0: i32, %arg1: i32, %arg2: i32) -> (i32, i32, i32) {
    %c0_i32 = arith.constant 0 : i32
    return %arg0, %arg1, %arg2 : i32, i32, i32
  }
}

</mosaic_0001>

<llo_original>
// kernel: _mend_update_padded.1
$region0: #{_mend_update_padded.1}
  #allocation0 [shape = 'u32[]', space=smem, size = 0x4, offset = 0x4, fixed_abs, tag = 'smem constant byte address 0x4 - core index']
  #allocation1 [shape = 'u32[144,128]{1,0:T(1,128)}', space=vmem, size = 0x12000, scoped, tag = 'internal scratch']
  %s0 = inlined_call_operand.hbm [shape: f32[2,8,128], index: 0, kind: input, shape index: {}]
  %s1 = inlined_call_operand.hbm [shape: f32[2,8,256], index: 1, kind: input, shape index: {}]
  %s2 = inlined_call_operand.hbm [shape: f32[2,256,128], index: 2, kind: input, shape index: {}, may-alias: {2,4}]
  %s3 = inlined_call_operand.vmem [shape: f32[2], index: 3, kind: input, shape index: {}]
  %s4 = inlined_call_operand.hbm [shape: f32[2,256,128], index: 4, kind: output, shape index: {}, may-alias: {2,4}]
  %s5 = sld [smem:[#allocation0]]
  $region65: #{_mend_update_padded.1} parent=0
    _
  %s7 = ssub.s32 1, %s5
  %s8 = scalar_select 0, %s7, %s5
  $region1: #{_mend_update_padded.1} parent=0
    #allocation2 [shape = 'u8[8192]{0}', space=vmem, size = 0x2000, scoped, tag = 'input window, operand 0']
    #allocation3 [shape = 's32[2]{0}', space=sflag, size = 0x8, scoped, tag = 'scoped memory for _mend_update_padded.1']
    #allocation4 [shape = 's32[2]{0}', space=sflag, size = 0x8, scoped, tag = 'scoped memory for _mend_update_padded.1']
    #allocation5 [shape = 's32[2]{0}', space=sflag, size = 0x8, scoped, tag = 'scoped memory for _mend_update_padded.1']
    #allocation6 [shape = 'u8[16384]{0}', space=vmem, size = 0x4000, scoped, tag = 'input window, operand 1']
    #allocation7 [shape = 's32[2]{0}', space=sflag, size = 0x8, scoped, tag = 'scoped memory for _mend_update_padded.1']
    #allocation8 [shape = 'u8[262144]{0}', space=vmem, size = 0x40000, scoped, tag = 'input window, operand 2']
    #allocation9 [shape = 'u8[512]{0}', space=smem, size = 0x200, scoped, tag = 'input window, operand 3, single buffered']
    #allocation10 [shape = 'u8[262144]{0}', space=vmem, size = 0x40000, scoped, tag = 'output window, operand 0']
    %9 = vsyncpa [#allocation3], 0
    %s10 = scalar_lea.sflag [#allocation3], 1
    %11 = vsyncpa %s10, 0
    %12 = vsyncpa [#allocation7], 0
    %s13 = scalar_lea.sflag [#allocation7], 1
    %14 = vsyncpa %s13, 0
    %15 = vsyncpa [#allocation5], 0
    %16 = vsyncpa [#allocation4], 0
    %s17 = scalar_lea.sflag [#allocation4], 1
    %18 = vsyncpa %s17, 0
    loop: start=0, step=1, limit=4
    $region2: #{_mend_update_padded.1} parent=1 // loop_pre_header
      _
    $region3: #{_mend_update_padded.1} parent=1 // loop_header
      %s20 = sphi 0, %s24
      %p21 = scmp.ge.s32.totalorder %s20, 4
      %s27 = sphi 0, %s46
      %s28 = sphi 0, %s42
      %s29 = sphi 0, %s38
      %s30 = sphi 0, %s27
      %s31 = sphi 0, %s28
      %s32 = sphi 0, %s29
      %s33 = sphi 0, %s30
      %s34 = sphi 0, %s31
      %s35 = sphi 0, %s32
      %s49 = sphi 0, %s51
      %s52 = sphi 0, %s49
      %s53 = sphi 0, %s52
      %s69 = sphi 0, %s53
      %s75 = sphi 0, %s77
      %s78 = sphi 0, %s75
      %s79 = sphi 0, %s78
      %s95 = sphi 0, %s79
      %s105 = sphi 0, %s107
      %s108 = sphi 0, %s105
      %s109 = sphi 0, %s108
      %s125 = sphi 0, %s109
      %s129 = sphi 0, %s129
      %s131 = sphi 0, %s129
      %s132 = sphi 0, %s131
      %s146 = sphi 0, %s132
      %s156 = sphi 0, %s158
      %s159 = sphi 0, %s156
      %s160 = sphi 0, %s159
      %s176 = sphi 0, %s160
    $region4: #{_mend_update_padded.1} parent=1 // loop_header_branch
      %23 = sbr.rel (%p21) target = $region8
    $region5: #{_mend_update_padded.1} parent=1 // loop_body
      %s25 = ssub.s32 %s20, 1
      %s26 = ssub.s32 %s20, 2
      %s36 = sadd.s32 1, %s29
      %p37 = scmp.ge.s32.totalorder %s36, 1
      %s38 = scalar_select %p37, 0, %s36
      %s39 = sadd.s32 1, %s28
      %s40 = scalar_select %p37, %s39, %s28
      %p41 = scmp.ge.s32.totalorder %s40, 1
      %s42 = scalar_select %p41, 0, %s40
      %s43 = sadd.s32 1, %s27
      %s44 = scalar_select %p41, %s43, %s27
      %p45 = scmp.ge.s32.totalorder %s44, 2
      %s46 = scalar_select %p45, 0, %s44
      %s47 = ssub.s32 %s27, %s46
      %p48 = scmp.eq.s32.totalorder %s47, 0
      %s50 = sadd.s32 %s49, 1
      %s51 = scalar_select %p48, %s49, %s50
      %p54 = pneg %p48
      %p55 = scmp.eq.s32.totalorder %s20, 1
      %p56 = por %p54, %p55
      %p57 = scmp.ne.s32.totalorder %s49, %s52
      %p58 = scmp.eq.s32.totalorder %s20, 0
      %p59 = por %p57, %p58
      %p60 = scmp.ne.s32.totalorder %s49, %s52
      %p61 = scmp.eq.s32.totalorder %s25, 1
      %p62 = por %p60, %p61
      %p63 = scmp.ne.s32.totalorder %s52, %s53
      %p64 = scmp.eq.s32.totalorder %s25, 0
      %p65 = por %p63, %p64
      %p66 = scmp.ne.s32.totalorder %s52, %s53
      %p67 = scmp.eq.s32.totalorder %s26, 1
      %p68 = por %p66, %p67
      %p70 = scmp.ne.s32.totalorder %s53, %s69
      %p71 = scmp.eq.s32.totalorder %s26, 0
      %p72 = por %p70, %p71
      %s73 = ssub.s32 %s27, %s46
      %p74 = scmp.eq.s32.totalorder %s73, 0
      %s76 = sadd.s32 %s75, 1
      %s77 = scalar_select %p74, %s75, %s76
      %p80 = pneg %p74
      %p81 = scmp.eq.s32.totalorder %s20, 1
      %p82 = por %p80, %p81
      %p83 = scmp.ne.s32.totalorder %s75, %s78
      %p84 = scmp.eq.s32.totalorder %s20, 0
      %p85 = por %p83, %p84
      %p86 = scmp.ne.s32.totalorder %s75, %s78
      %p87 = scmp.eq.s32.totalorder %s25, 1
      %p88 = por %p86, %p87
      %p89 = scmp.ne.s32.totalorder %s78, %s79
      %p90 = scmp.eq.s32.totalorder %s25, 0
      %p91 = por %p89, %p90
      %p92 = scmp.ne.s32.totalorder %s78, %s79
      %p93 = scmp.eq.s32.totalorder %s26, 1
      %p94 = por %p92, %p93
      %p96 = scmp.ne.s32.totalorder %s79, %s95
      %p97 = scmp.eq.s32.totalorder %s26, 0
      %p98 = por %p96, %p97
      %s99 = ssub.s32 %s27, %s46
      %s100 = ssub.s32 %s28, %s42
      %s101 = sor.u32 %s99, %s100
      %s102 = ssub.s32 %s29, %s38
      %s103 = sor.u32 %s101, %s102
      %p104 = scmp.eq.s32.totalorder %s103, 0
      %s106 = sadd.s32 %s105, 1
      %s107 = scalar_select %p104, %s105, %s106
      %p110 = pneg %p104
      %p111 = scmp.eq.s32.totalorder %s20, 1
      %p112 = por %p110, %p111
      %p113 = scmp.ne.s32.totalorder %s105, %s108
      %p114 = scmp.eq.s32.totalorder %s20, 0
      %p115 = por %p113, %p114
      %p116 = scmp.ne.s32.totalorder %s105, %s108
      %p117 = scmp.eq.s32.totalorder %s25, 1
      %p118 = por %p116, %p117
      %p119 = scmp.ne.s32.totalorder %s108, %s109
      %p120 = scmp.eq.s32.totalorder %s25, 0
      %p121 = por %p119, %p120
      %p122 = scmp.ne.s32.totalorder %s108, %s109
      %p123 = scmp.eq.s32.totalorder %s26, 1
      %p124 = por %p122, %p123
      %p126 = scmp.ne.s32.totalorder %s109, %s125
      %p127 = scmp.eq.s32.totalorder %s26, 0
      %p128 = por %p126, %p127
      %s130 = sadd.s32 %s129, 1
      %p133 = scmp.eq.s32.totalorder %s20, 1
      %p134 = scmp.ne.s32.totalorder %s129, %s131
      %p135 = scmp.eq.s32.totalorder %s20, 0
      %p136 = por %p134, %p135
      %p137 = scmp.ne.s32.totalorder %s129, %s131
      %p138 = scmp.eq.s32.totalorder %s25, 1
      %p139 = por %p137, %p138
      %p140 = scmp.ne.s32.totalorder %s131, %s132
      %p141 = scmp.eq.s32.totalorder %s25, 0
      %p142 = por %p140, %p141
      %p143 = scmp.ne.s32.totalorder %s131, %s132
      %p144 = scmp.eq.s32.totalorder %s26, 1
      %p145 = por %p143, %p144
      %p147 = scmp.ne.s32.totalorder %s132, %s146
      %p148 = scmp.eq.s32.totalorder %s26, 0
      %p149 = por %p147, %p148
      %s150 = ssub.s32 %s27, %s46
      %s151 = ssub.s32 %s28, %s42
      %s152 = sor.u32 %s150, %s151
      %s153 = ssub.s32 %s29, %s38
      %s154 = sor.u32 %s152, %s153
      %p155 = scmp.eq.s32.totalorder %s154, 0
      %s157 = sadd.s32 %s156, 1
      %s158 = scalar_select %p155, %s156, %s157
      %p161 = pneg %p155
      %p162 = scmp.eq.s32.totalorder %s20, 1
      %p163 = por %p161, %p162
      %p164 = scmp.ne.s32.totalorder %s156, %s159
      %p165 = scmp.eq.s32.totalorder %s20, 0
      %p166 = por %p164, %p165
      %p167 = scmp.ne.s32.totalorder %s156, %s159
      %p168 = scmp.eq.s32.totalorder %s25, 1
      %p169 = por %p167, %p168
      %p170 = scmp.ne.s32.totalorder %s159, %s160
      %p171 = scmp.eq.s32.totalorder %s25, 0
      %p172 = por %p170, %p171
      %p173 = scmp.ne.s32.totalorder %s159, %s160
      %p174 = scmp.eq.s32.totalorder %s26, 1
      %p175 = por %p173, %p174
      %p177 = scmp.ne.s32.totalorder %s160, %s176
      %p178 = scmp.eq.s32.totalorder %s26, 0
      %p179 = por %p177, %p178
      %p180 = scmp.le.s32.totalorder 1, %s20
      %p181 = scmp.lt.s32.totalorder %s20, 3
      %p182 = pnand %p180, %p181
      %p183 = pneg %p182
      // Predicated region
      $region9: #{_mend_update_padded.1} parent=5 // pred_check
        _
      $region10: #{_mend_update_padded.1} parent=5 // pred_check_branch
        %185 = sbr.rel (%p182) target = $region12
      $region11: #{_mend_update_padded.1} parent=5 // pred_region
        %s186 = ssub.s32 %s20, 1
        // Predicated region
        $region13: #{_mend_update_padded.1} parent=11 // pred_check
          %p187 = pneg %p142
        $region14: #{_mend_update_padded.1} parent=11 // pred_check_branch
          %189 = sbr.rel (%p187) target = $region16
        $region15: #{_mend_update_padded.1} parent=11 // pred_region
          %s191 = ssub.s32 16, 16
          %192 = vsyncadd [#allocation5], %s191
          %s194 = sshll.u32 %s3, 4
          %s195 = int_to_ptr.vmem [resolvable:$true] %s194
          %197 = dma.vmem_to_smem %s195, 16, [#allocation9], [#allocation5]
        $region16: #{_mend_update_padded.1} parent=11 // pred_fallthru
          _
      $region12: #{_mend_update_padded.1} parent=5 // pred_fallthru
        _
      %p198 = scmp.lt.s32.totalorder %s20, 2
      // Predicated region
      $region17: #{_mend_update_padded.1} parent=5 // pred_check
        %p199 = pneg %p198
      $region18: #{_mend_update_padded.1} parent=5 // pred_check_branch
        %201 = sbr.rel (%p199) target = $region20
      $region19: #{_mend_update_padded.1} parent=5 // pred_region
        // Predicated region
        $region21: #{_mend_update_padded.1} parent=19 // pred_check
          %p202 = pneg %p59
        $region22: #{_mend_update_padded.1} parent=19 // pred_check_branch
          %204 = sbr.rel (%p202) target = $region24
        $region23: #{_mend_update_padded.1} parent=19 // pred_region
          %s205 = sand.u32 %s49, 1
          %s206 = scalar_lea.sflag [#allocation3], %s205
          %s207 = sand.u32 %s49, 1
          %s208 = smul.addr %s207, 8
          %s209 = scalar_lea.vmem [#allocation2], %s208
          %s211 = ssub.s32 128, 128
          %212 = vsyncadd %s206, %s211
          %s213 = smul.addr %s27, 128
          %s214 = scalar_lea.hbm %s0, %s213
          %s216 = sshll.u32 %s209, 4
          %s217 = int_to_ptr.vmem [resolvable:$true] %s216
          %219 = dma.hbm_to_vmem [thread:$0]  %s214, 128, %s217, %s206
        $region24: #{_mend_update_padded.1} parent=19 // pred_fallthru
          _
        // Predicated region
        $region25: #{_mend_update_padded.1} parent=19 // pred_check
          %p220 = pneg %p85
        $region26: #{_mend_update_padded.1} parent=19 // pred_check_branch
          %222 = sbr.rel (%p220) target = $region28
        $region27: #{_mend_update_padded.1} parent=19 // pred_region
          %s223 = sand.u32 %s20, 1
          %s224 = scalar_lea.sflag [#allocation7], %s223
          %s225 = sand.u32 %s75, 1
          %s226 = smul.addr %s225, 16
          %s227 = scalar_lea.vmem [#allocation6], %s226
          %s229 = ssub.s32 256, 256
          %230 = vsyncadd %s224, %s229
          %s231 = smul.addr %s27, 2
          %s232 = smul.addr %s231, 128
          %s233 = scalar_lea.hbm %s1, %s232
          %s235 = sshll.u32 %s227, 4
          %s236 = int_to_ptr.vmem [resolvable:$true] %s235
          %238 = dma.hbm_to_vmem [thread:$0]  %s233, 256, %s236, %s224
        $region28: #{_mend_update_padded.1} parent=19 // pred_fallthru
          _
        // Predicated region
        $region29: #{_mend_update_padded.1} parent=19 // pred_check
          %p239 = pneg %p115
        $region30: #{_mend_update_padded.1} parent=19 // pred_check_branch
          %241 = sbr.rel (%p239) target = $region32
        $region31: #{_mend_update_padded.1} parent=19 // pred_region
          %s242 = sand.u32 %s20, 1
          %s243 = scalar_lea.sflag [#allocation7], %s242
          %s244 = sand.u32 %s105, 1
          %s245 = smul.addr %s244, 256
          %s246 = scalar_lea.vmem [#allocation8], %s245
          %s247 = smul.u32 32, %s28
          %s249 = ssub.s32 4096, 4096
          %250 = vsyncadd %s243, %s249
          %s251 = sadd.s32 %s29, %s247
          %s252 = smul.addr %s27, 32
          %s253 = sadd.s32 %s251, %s252
          %s254 = smul.addr %s253, 128
          %s255 = scalar_lea.hbm %s2, %s254
          %s256 = sshll.u32 %s246, 4
          %s257 = int_to_ptr.vmem [resolvable:$true] %s256
          %262 = dma.hbm_to_vmem [thread:$0]  %s255, 4096, %s257, %s243, 128, 128, 8
        $region32: #{_mend_update_padded.1} parent=19 // pred_fallthru
          _
      $region20: #{_mend_update_padded.1} parent=5 // pred_fallthru
        _
      %p263 = scmp.le.s32.totalorder 1, %s20
      %p264 = scmp.lt.s32.totalorder %s20, 3
      %p265 = pnand %p263, %p264
      %p266 = pneg %p265
      // Predicated region
      $region33: #{_mend_update_padded.1} parent=5 // pred_check
        _
      $region34: #{_mend_update_padded.1} parent=5 // pred_check_branch
        %268 = sbr.rel (%p265) target = $region36
      $region35: #{_mend_update_padded.1} parent=5 // pred_region
        %s269 = ssub.s32 %s20, 1
        %s270 = sand.u32 %s52, 1
        %s271 = scalar_lea.sflag [#allocation3], %s270
        %s272 = sand.u32 %s52, 1
        %s273 = smul.addr %s272, 8
        %s274 = scalar_lea.vmem [#allocation2], %s273
        // Predicated region
        $region37: #{_mend_update_padded.1} parent=35 // pred_check
          %p275 = pneg %p65
        $region38: #{_mend_update_padded.1} parent=35 // pred_check_branch
          %277 = sbr.rel (%p275) target = $region40
        $region39: #{_mend_update_padded.1} parent=35 // pred_region
          %278 = dma.done %s271, 128
        $region40: #{_mend_update_padded.1} parent=35 // pred_fallthru
          _
        %s279 = sand.u32 %s25, 1
        %s280 = scalar_lea.sflag [#allocation7], %s279
        %s281 = sand.u32 %s78, 1
        %s282 = smul.addr %s281, 16
        %s283 = scalar_lea.vmem [#allocation6], %s282
        // Predicated region
        $region41: #{_mend_update_padded.1} parent=35 // pred_check
          %p284 = pneg %p91
        $region42: #{_mend_update_padded.1} parent=35 // pred_check_branch
          %286 = sbr.rel (%p284) target = $region44
        $region43: #{_mend_update_padded.1} parent=35 // pred_region
          %287 = dma.done %s280, 256
        $region44: #{_mend_update_padded.1} parent=35 // pred_fallthru
          _
        %s288 = sand.u32 %s25, 1
        %s289 = scalar_lea.sflag [#allocation7], %s288
        %s290 = sand.u32 %s108, 1
        %s291 = smul.addr %s290, 256
        %s292 = scalar_lea.vmem [#allocation8], %s291
        // Predicated region
        $region45: #{_mend_update_padded.1} parent=35 // pred_check
          %p293 = pneg %p121
        $region46: #{_mend_update_padded.1} parent=35 // pred_check_branch
          %295 = sbr.rel (%p293) target = $region48
        $region47: #{_mend_update_padded.1} parent=35 // pred_region
          %296 = dma.done %s289, 4096
        $region48: #{_mend_update_padded.1} parent=35 // pred_fallthru
          _
        // Predicated region
        $region49: #{_mend_update_padded.1} parent=35 // pred_check
          %p297 = pneg %p142
        $region50: #{_mend_update_padded.1} parent=35 // pred_check_branch
          %299 = sbr.rel (%p297) target = $region52
        $region51: #{_mend_update_padded.1} parent=35 // pred_region
          %300 = dma.done [#allocation5], 16
        $region52: #{_mend_update_padded.1} parent=35 // pred_fallthru
          _
        %301 = sfence
        %s302 = sand.u32 %s52, 1
        %s303 = scalar_lea.sflag [#allocation3], %s302
        %s304 = sand.u32 %s52, 1
        %s305 = smul.addr %s304, 8
        %s306 = scalar_lea.vmem [#allocation2], %s305
        %p307 = pneg %p65
        %p308 = pneg %p62
        %s309 = sand.u32 %s25, 1
        %s310 = scalar_lea.sflag [#allocation7], %s309
        %s311 = sand.u32 %s78, 1
        %s312 = smul.addr %s311, 16
        %s313 = scalar_lea.vmem [#allocation6], %s312
        %p314 = pneg %p91
        %p315 = pneg %p88
        %s316 = sand.u32 %s25, 1
        %s317 = scalar_lea.sflag [#allocation7], %s316
        %s318 = sand.u32 %s108, 1
        %s319 = smul.addr %s318, 256
        %s320 = scalar_lea.vmem [#allocation8], %s319
        %p321 = pneg %p121
        %p322 = pneg %p118
        %p323 = pneg %p142
        %p324 = pneg %p139
        %p325 = pneg %p172
        %p326 = pneg %p169
        %s327 = sand.u32 %s159, 1
        %s328 = scalar_lea.sflag [#allocation4], %s327
        %s329 = sand.u32 %s159, 1
        %s330 = smul.addr %s329, 256
        %s331 = scalar_lea.vmem [#allocation10], %s330
        %s332 = smul.u32 32, %s31
        %s333 = smul.u32 32, %s31
        %s335 = smul.u32 %s32, 128
        %s336 = sshra.s32 %s335, 7
        %s337 = sand.u32 %s335, 127
        %s338 = scalar_lea.vmem %s274, %s336 [#allocation2]
        %v339 = vld [vmem:[%s338] sm:$0xff]
        %s340 = smul.u32 %s31, 256
        %s341 = sshra.s32 %s340, 7
        %s342 = sand.u32 %s340, 127
        %s343 = smul.addr %s341, 8
        %s344 = scalar_lea.vmem %s283, %s343 [#allocation6]
        %v345 = vld [vmem:[%s344] sm:$0xff]
        %v346 = vld [vmem:[%s344 + $0x8] sm:$0xff]
        %s347 = sld [smem:[#allocation9 + %s30]]
        %s348 = ssub.f32 0.0, %s347
        %v349 = vstv %s348
        %v350 = vmul.f32 %v345, %v349
        %v351 = vmul.f32 %v346, %v349
        %v352 = vpack.c.bf16 %v350, %v350
        %v353 = vpack.c.bf16 %v351, %v351
        %v354 = vpack.c.bf16 %v339, %v339
        %355 = vxpose.xlu0.c.b16.start [1/8] %v352, 128
        %356 = vxpose.xlu0.c.b16.cont [2/8] 0, 128
        %357 = vxpose.xlu0.c.b16.cont [3/8] 0, 128
        %358 = vxpose.xlu0.c.b16.cont [4/8] 0, 128
        %359 = vxpose.xlu0.c.b16.cont [5/8] 0, 128
        %360 = vxpose.xlu0.c.b16.cont [6/8] 0, 128
        %361 = vxpose.xlu0.c.b16.cont [7/8] 0, 128
        %362 = vxpose.xlu0.c.b16.end [8/8] 0, 128
        %v363 = vpop.trf.xlu0
        %v364 = vpop.trf.xlu0
        %v365 = vpop.trf.xlu0
        %v366 = vpop.trf.xlu0
        %v367 = vpop.trf.xlu0
        %v368 = vpop.trf.xlu0
        %v369 = vpop.trf.xlu0
        %v370 = vpop.trf.xlu0
        %371 = vxpose.xlu0.c.b16.start [1/8] %v353, 128
        %372 = vxpose.xlu0.c.b16.cont [2/8] 0, 128
        %373 = vxpose.xlu0.c.b16.cont [3/8] 0, 128
        %374 = vxpose.xlu0.c.b16.cont [4/8] 0, 128
        %375 = vxpose.xlu0.c.b16.cont [5/8] 0, 128
        %376 = vxpose.xlu0.c.b16.cont [6/8] 0, 128
        %377 = vxpose.xlu0.c.b16.cont [7/8] 0, 128
        %378 = vxpose.xlu0.c.b16.end [8/8] 0, 128
        %v379 = vpop.trf.xlu0
        %v380 = vpop.trf.xlu0
        %v381 = vpop.trf.xlu0
        %v382 = vpop.trf.xlu0
        %v383 = vpop.trf.xlu0
        %v384 = vpop.trf.xlu0
        %v385 = vpop.trf.xlu0
        %v386 = vpop.trf.xlu0
        %vm387 = vcmask 64512
        %v389 = vsel %vm387, %v363, 0
        %v392 = vsel %vm387, %v364, 0
        %v395 = vsel %vm387, %v365, 0
        %v398 = vsel %vm387, %v366, 0
        %v401 = vsel %vm387, %v367, 0
        %v404 = vsel %vm387, %v368, 0
        %v407 = vsel %vm387, %v369, 0
        %v410 = vsel %vm387, %v370, 0
        %v413 = vsel %vm387, %v379, 0
        %v416 = vsel %vm387, %v380, 0
        %v419 = vsel %vm387, %v381, 0
        %v422 = vsel %vm387, %v382, 0
        %v425 = vsel %vm387, %v383, 0
        %v428 = vsel %vm387, %v384, 0
        %v431 = vsel %vm387, %v385, 0
        %v434 = vsel %vm387, %v386, 0
        %vm436 = vcmask 1043456
        %v438 = vsel %vm436, %v354, 0
        %440 = vmatprep.subr.bf16.mxu0 0
        %441 = vmatpush1.bf16.msra.mxu0 0
        %442 = vmatprep.subr.bf16.mxu0 0
        %443 = vmatpush1.bf16.msra.mxu0 0
        %444 = vmatprep.subr.bf16.mxu0 0
        %445 = vmatpush1.bf16.msra.mxu0 0
        %446 = vmatprep.subr.bf16.mxu0 0
        %447 = vmatpush1.bf16.msra.mxu0 0
        %448 = vmatprep.subr.bf16.mxu0 0
        %449 = vmatpush1.bf16.msra.mxu0 0
        %450 = vmatprep.subr.bf16.mxu0 0
        %451 = vmatpush1.bf16.msra.mxu0 0
        %452 = vmatprep.subr.bf16.mxu0 0
        %453 = vmatpush1.bf16.msra.mxu0 0
        %454 = vmatprep.subr.bf16.mxu0 0
        %455 = vmatpush1.bf16.msra.mxu0 %v438
        %456 = vmatprep.subr.bf16.mxu0 0
        %457 = vmatpush2.bf16.msra.mxu0 0
        %458 = vmatprep.subr.bf16.mxu0 0
        %459 = vmatpush2.bf16.msra.mxu0 0
        %460 = vmatprep.subr.bf16.mxu0 0
        %461 = vmatpush2.bf16.msra.mxu0 0
        %462 = vmatprep.subr.bf16.mxu0 0
        %463 = vmatpush2.bf16.msra.mxu0 0
        %464 = vmatprep.subr.bf16.mxu0 0
        %465 = vmatpush2.bf16.msra.mxu0 0
        %466 = vmatprep.subr.bf16.mxu0 0
        %467 = vmatpush2.bf16.msra.mxu0 0
        %468 = vmatprep.subr.bf16.mxu0 0
        %469 = vmatpush2.bf16.msra.mxu0 0
        %470 = vmatprep.subr.bf16.mxu0 0
        %471 = vmatpush2.bf16.msra.mxu0 0
        %472 = vmatprep.mubr.bf16.mxu0 0
        %473 = vmatmul.mubr.bf16.gmra.mxu0 %v389
        %v474 = vpop.f32.mrf.mxu0
        %v475 = vadd.f32 0.0, %v474
        %v476 = vpop.f32.mrf.mxu0
        %v477 = vpop.f32.mrf.mxu0
        %v478 = vadd.f32 0.0, %v477
        %v479 = vpop.f32.mrf.mxu0
        %480 = vmatprep.mubr.bf16.mxu0 0
        %481 = vmatmul.mubr.bf16.gmra.mxu0 %v392
        %v482 = vpop.f32.mrf.mxu0
        %v483 = vadd.f32 0.0, %v482
        %v484 = vpop.f32.mrf.mxu0
        %v485 = vpop.f32.mrf.mxu0
        %v486 = vadd.f32 0.0, %v485
        %v487 = vpop.f32.mrf.mxu0
        %488 = vmatprep.mubr.bf16.mxu0 0
        %489 = vmatmul.mubr.bf16.gmra.mxu0 %v395
        %v490 = vpop.f32.mrf.mxu0
        %v491 = vadd.f32 0.0, %v490
        %v492 = vpop.f32.mrf.mxu0
        %v493 = vpop.f32.mrf.mxu0
        %v494 = vadd.f32 0.0, %v493
        %v495 = vpop.f32.mrf.mxu0
        %496 = vmatprep.mubr.bf16.mxu0 0
        %497 = vmatmul.mubr.bf16.gmra.mxu0 %v398
        %v498 = vpop.f32.mrf.mxu0
        %v499 = vadd.f32 0.0, %v498
        %v500 = vpop.f32.mrf.mxu0
        %v501 = vpop.f32.mrf.mxu0
        %v502 = vadd.f32 0.0, %v501
        %v503 = vpop.f32.mrf.mxu0
        %504 = vmatprep.mubr.bf16.mxu0 0
        %505 = vmatmul.mubr.bf16.gmra.mxu0 %v401
        %v506 = vpop.f32.mrf.mxu0
        %v507 = vadd.f32 0.0, %v506
        %v508 = vpop.f32.mrf.mxu0
        %v509 = vpop.f32.mrf.mxu0
        %v510 = vadd.f32 0.0, %v509
        %v511 = vpop.f32.mrf.mxu0
        %512 = vmatprep.mubr.bf16.mxu0 0
        %513 = vmatmul.mubr.bf16.gmra.mxu0 %v404
        %v514 = vpop.f32.mrf.mxu0
        %v515 = vadd.f32 0.0, %v514
        %v516 = vpop.f32.mrf.mxu0
        %v517 = vpop.f32.mrf.mxu0
        %v518 = vadd.f32 0.0, %v517
        %v519 = vpop.f32.mrf.mxu0
        %520 = vmatprep.mubr.bf16.mxu0 0
        %521 = vmatmul.mubr.bf16.gmra.mxu0 %v407
        %v522 = vpop.f32.mrf.mxu0
        %v523 = vadd.f32 0.0, %v522
        %v524 = vpop.f32.mrf.mxu0
        %v525 = vpop.f32.mrf.mxu0
        %v526 = vadd.f32 0.0, %v525
        %v527 = vpop.f32.mrf.mxu0
        %528 = vmatprep.mubr.bf16.mxu0 0
        %529 = vmatmul.mubr.bf16.gmra.mxu0 %v410
        %v530 = vpop.f32.mrf.mxu0
        %v531 = vadd.f32 0.0, %v530
        %v532 = vpop.f32.mrf.mxu0
        %v533 = vpop.f32.mrf.mxu0
        %v534 = vadd.f32 0.0, %v533
        %v535 = vpop.f32.mrf.mxu0
        %536 = vmatprep.mubr.bf16.mxu0 0
        %537 = vmatmul.mubr.bf16.gmra.mxu0 %v413
        %v538 = vpop.f32.mrf.mxu0
        %v539 = vadd.f32 0.0, %v538
        %v540 = vpop.f32.mrf.mxu0
        %v541 = vpop.f32.mrf.mxu0
        %v542 = vadd.f32 0.0, %v541
        %v543 = vpop.f32.mrf.mxu0
        %544 = vmatprep.mubr.bf16.mxu0 0
        %545 = vmatmul.mubr.bf16.gmra.mxu0 %v416
        %v546 = vpop.f32.mrf.mxu0
        %v547 = vadd.f32 0.0, %v546
        %v548 = vpop.f32.mrf.mxu0
        %v549 = vpop.f32.mrf.mxu0
        %v550 = vadd.f32 0.0, %v549
        %v551 = vpop.f32.mrf.mxu0
        %552 = vmatprep.mubr.bf16.mxu0 0
        %553 = vmatmul.mubr.bf16.gmra.mxu0 %v419
        %v554 = vpop.f32.mrf.mxu0
        %v555 = vadd.f32 0.0, %v554
        %v556 = vpop.f32.mrf.mxu0
        %v557 = vpop.f32.mrf.mxu0
        %v558 = vadd.f32 0.0, %v557
        %v559 = vpop.f32.mrf.mxu0
        %560 = vmatprep.mubr.bf16.mxu0 0
        %561 = vmatmul.mubr.bf16.gmra.mxu0 %v422
        %v562 = vpop.f32.mrf.mxu0
        %v563 = vadd.f32 0.0, %v562
        %v564 = vpop.f32.mrf.mxu0
        %v565 = vpop.f32.mrf.mxu0
        %v566 = vadd.f32 0.0, %v565
        %v567 = vpop.f32.mrf.mxu0
        %568 = vmatprep.mubr.bf16.mxu0 0
        %569 = vmatmul.mubr.bf16.gmra.mxu0 %v425
        %v570 = vpop.f32.mrf.mxu0
        %v571 = vadd.f32 0.0, %v570
        %v572 = vpop.f32.mrf.mxu0
        %v573 = vpop.f32.mrf.mxu0
        %v574 = vadd.f32 0.0, %v573
        %v575 = vpop.f32.mrf.mxu0
        %576 = vmatprep.mubr.bf16.mxu0 0
        %577 = vmatmul.mubr.bf16.gmra.mxu0 %v428
        %v578 = vpop.f32.mrf.mxu0
        %v579 = vadd.f32 0.0, %v578
        %v580 = vpop.f32.mrf.mxu0
        %v581 = vpop.f32.mrf.mxu0
        %v582 = vadd.f32 0.0, %v581
        %v583 = vpop.f32.mrf.mxu0
        %584 = vmatprep.mubr.bf16.mxu0 0
        %585 = vmatmul.mubr.bf16.gmra.mxu0 %v431
        %v586 = vpop.f32.mrf.mxu0
        %v587 = vadd.f32 0.0, %v586
        %v588 = vpop.f32.mrf.mxu0
        %v589 = vpop.f32.mrf.mxu0
        %v590 = vadd.f32 0.0, %v589
        %v591 = vpop.f32.mrf.mxu0
        %592 = vmatprep.mubr.bf16.mxu0 0
        %593 = vmatmul.mubr.bf16.gmra.mxu0 %v434
        %v594 = vpop.f32.mrf.mxu0
        %v595 = vadd.f32 0.0, %v594
        %v596 = vpop.f32.mrf.mxu0
        %v597 = vpop.f32.mrf.mxu0
        %v598 = vadd.f32 0.0, %v597
        %v599 = vpop.f32.mrf.mxu0
        %600 = vdwg.mxu0
        %v601 = vld [vmem:[%s292] sm:$0xff]
        %v602 = vld [vmem:[%s292 + $0x8] sm:$0xff]
        %v603 = vld [vmem:[%s292 + $0x10] sm:$0xff]
        %v604 = vld [vmem:[%s292 + $0x18] sm:$0xff]
        %v605 = vld [vmem:[%s292 + $0x20] sm:$0xff]
        %v606 = vld [vmem:[%s292 + $0x28] sm:$0xff]
        %v607 = vld [vmem:[%s292 + $0x30] sm:$0xff]
        %v608 = vld [vmem:[%s292 + $0x38] sm:$0xff]
        %v609 = vld [vmem:[%s292 + $0x40] sm:$0xff]
        %v610 = vld [vmem:[%s292 + $0x48] sm:$0xff]
        %v611 = vld [vmem:[%s292 + $0x50] sm:$0xff]
        %v612 = vld [vmem:[%s292 + $0x58] sm:$0xff]
        %v613 = vld [vmem:[%s292 + $0x60] sm:$0xff]
        %v614 = vld [vmem:[%s292 + $0x68] sm:$0xff]
        %v615 = vld [vmem:[%s292 + $0x70] sm:$0xff]
        %v616 = vld [vmem:[%s292 + $0x78] sm:$0xff]
        %v617 = vld [vmem:[%s292 + $0x80] sm:$0xff]
        %v618 = vld [vmem:[%s292 + $0x88] sm:$0xff]
        %v619 = vld [vmem:[%s292 + $0x90] sm:$0xff]
        %v620 = vld [vmem:[%s292 + $0x98] sm:$0xff]
        %v621 = vld [vmem:[%s292 + $0xa0] sm:$0xff]
        %v622 = vld [vmem:[%s292 + $0xa8] sm:$0xff]
        %v623 = vld [vmem:[%s292 + $0xb0] sm:$0xff]
        %v624 = vld [vmem:[%s292 + $0xb8] sm:$0xff]
        %v625 = vld [vmem:[%s292 + $0xc0] sm:$0xff]
        %v626 = vld [vmem:[%s292 + $0xc8] sm:$0xff]
        %v627 = vld [vmem:[%s292 + $0xd0] sm:$0xff]
        %v628 = vld [vmem:[%s292 + $0xd8] sm:$0xff]
        %v629 = vld [vmem:[%s292 + $0xe0] sm:$0xff]
        %v630 = vld [vmem:[%s292 + $0xe8] sm:$0xff]
        %v631 = vld [vmem:[%s292 + $0xf0] sm:$0xff]
        %v632 = vld [vmem:[%s292 + $0xf8] sm:$0xff]
        %v633 = vadd.f32 %v601, %v475
        %v634 = vadd.f32 %v602, %v478
        %v635 = vadd.f32 %v603, %v483
        %v636 = vadd.f32 %v604, %v486
        %v637 = vadd.f32 %v605, %v491
        %v638 = vadd.f32 %v606, %v494
        %v639 = vadd.f32 %v607, %v499
        %v640 = vadd.f32 %v608, %v502
        %v641 = vadd.f32 %v609, %v507
        %v642 = vadd.f32 %v610, %v510
        %v643 = vadd.f32 %v611, %v515
        %v644 = vadd.f32 %v612, %v518
        %v645 = vadd.f32 %v613, %v523
        %v646 = vadd.f32 %v614, %v526
        %v647 = vadd.f32 %v615, %v531
        %v648 = vadd.f32 %v616, %v534
        %v649 = vadd.f32 %v617, %v539
        %v650 = vadd.f32 %v618, %v542
        %v651 = vadd.f32 %v619, %v547
        %v652 = vadd.f32 %v620, %v550
        %v653 = vadd.f32 %v621, %v555
        %v654 = vadd.f32 %v622, %v558
        %v655 = vadd.f32 %v623, %v563
        %v656 = vadd.f32 %v624, %v566
        %v657 = vadd.f32 %v625, %v571
        %v658 = vadd.f32 %v626, %v574
        %v659 = vadd.f32 %v627, %v579
        %v660 = vadd.f32 %v628, %v582
        %v661 = vadd.f32 %v629, %v587
        %v662 = vadd.f32 %v630, %v590
        %v663 = vadd.f32 %v631, %v595
        %v664 = vadd.f32 %v632, %v598
        %665 = vst [vmem:[%s331] sm:$0xff] %v633
        %666 = vst [vmem:[%s331 + $0x8] sm:$0xff] %v634
        %667 = vst [vmem:[%s331 + $0x10] sm:$0xff] %v635
        %668 = vst [vmem:[%s331 + $0x18] sm:$0xff] %v636
        %669 = vst [vmem:[%s331 + $0x20] sm:$0xff] %v637
        %670 = vst [vmem:[%s331 + $0x28] sm:$0xff] %v638
        %671 = vst [vmem:[%s331 + $0x30] sm:$0xff] %v639
        %672 = vst [vmem:[%s331 + $0x38] sm:$0xff] %v640
        %673 = vst [vmem:[%s331 + $0x40] sm:$0xff] %v641
        %674 = vst [vmem:[%s331 + $0x48] sm:$0xff] %v642
        %675 = vst [vmem:[%s331 + $0x50] sm:$0xff] %v643
        %676 = vst [vmem:[%s331 + $0x58] sm:$0xff] %v644
        %677 = vst [vmem:[%s331 + $0x60] sm:$0xff] %v645
        %678 = vst [vmem:[%s331 + $0x68] sm:$0xff] %v646
        %679 = vst [vmem:[%s331 + $0x70] sm:$0xff] %v647
        %680 = vst [vmem:[%s331 + $0x78] sm:$0xff] %v648
        %681 = vst [vmem:[%s331 + $0x80] sm:$0xff] %v649
        %682 = vst [vmem:[%s331 + $0x88] sm:$0xff] %v650
        %683 = vst [vmem:[%s331 + $0x90] sm:$0xff] %v651
        %684 = vst [vmem:[%s331 + $0x98] sm:$0xff] %v652
        %685 = vst [vmem:[%s331 + $0xa0] sm:$0xff] %v653
        %686 = vst [vmem:[%s331 + $0xa8] sm:$0xff] %v654
        %687 = vst [vmem:[%s331 + $0xb0] sm:$0xff] %v655
        %688 = vst [vmem:[%s331 + $0xb8] sm:$0xff] %v656
        %689 = vst [vmem:[%s331 + $0xc0] sm:$0xff] %v657
        %690 = vst [vmem:[%s331 + $0xc8] sm:$0xff] %v658
        %691 = vst [vmem:[%s331 + $0xd0] sm:$0xff] %v659
        %692 = vst [vmem:[%s331 + $0xd8] sm:$0xff] %v660
        %693 = vst [vmem:[%s331 + $0xe0] sm:$0xff] %v661
        %694 = vst [vmem:[%s331 + $0xe8] sm:$0xff] %v662
        %695 = vst [vmem:[%s331 + $0xf0] sm:$0xff] %v663
        %696 = vst [vmem:[%s331 + $0xf8] sm:$0xff] %v664
        %s697 = sand.u32 %s159, 1
        %s698 = scalar_lea.sflag [#allocation4], %s697
        %s699 = sand.u32 %s159, 1
        %s700 = smul.addr %s699, 256
        %s701 = scalar_lea.vmem [#allocation10], %s700
        // Predicated region
        $region53: #{_mend_update_padded.1} parent=35 // pred_check
          %p702 = pneg %p169
        $region54: #{_mend_update_padded.1} parent=35 // pred_check_branch
          %704 = sbr.rel (%p702) target = $region56
        $region55: #{_mend_update_padded.1} parent=35 // pred_region
          %s705 = smul.u32 32, %s31
          %s707 = ssub.s32 4096, 4096
          %708 = vsyncadd %s698, %s707
          %s709 = sadd.s32 %s32, %s705
          %s710 = smul.addr %s30, 32
          %s711 = sadd.s32 %s709, %s710
          %s712 = smul.addr %s711, 128
          %s713 = scalar_lea.hbm %s4, %s712
          %s714 = sshll.u32 %s701, 4
          %s715 = int_to_ptr.vmem [resolvable:$true] %s714
          %720 = dma.vmem_to_hbm [thread:$0]  %s715, 4096, %s713, %s698, 128, 128, 8
        $region56: #{_mend_update_padded.1} parent=35 // pred_fallthru
          _
      $region36: #{_mend_update_padded.1} parent=5 // pred_fallthru
        _
      %p721 = scmp.le.s32.totalorder 2, %s20
      // Predicated region
      $region57: #{_mend_update_padded.1} parent=5 // pred_check
        %p722 = pneg %p721
      $region58: #{_mend_update_padded.1} parent=5 // pred_check_branch
        %724 = sbr.rel (%p722) target = $region60
      $region59: #{_mend_update_padded.1} parent=5 // pred_region
        %s725 = ssub.s32 %s20, 2
        // Predicated region
        $region61: #{_mend_update_padded.1} parent=59 // pred_check
          %p726 = pneg %p175
        $region62: #{_mend_update_padded.1} parent=59 // pred_check_branch
          %728 = sbr.rel (%p726) target = $region64
        $region63: #{_mend_update_padded.1} parent=59 // pred_region
          %s729 = sand.u32 %s160, 1
          %s730 = scalar_lea.sflag [#allocation4], %s729
          %s731 = sand.u32 %s160, 1
          %s732 = smul.addr %s731, 256
          %s733 = scalar_lea.vmem [#allocation10], %s732
          %734 = dma.done %s730, 4096
        $region64: #{_mend_update_padded.1} parent=59 // pred_fallthru
          _
      $region60: #{_mend_update_padded.1} parent=5 // pred_fallthru
        _
    $region6: #{_mend_update_padded.1} parent=1 // loop_footer
      %s24 = sadd.s32 1, %s20
    $region7: #{_mend_update_padded.1} parent=1 // loop_footer_branch
      %19 = sbr.rel target = $region3
    $region8: #{_mend_update_padded.1} parent=1 // loop_exit
      _
    %735 = vsyncpa [#allocation3], 1
    %s736 = scalar_lea.sflag [#allocation3], 1
    %737 = vsyncpa %s736, 1
    %738 = vsyncpa [#allocation7], 1
    %s739 = scalar_lea.sflag [#allocation7], 1
    %740 = vsyncpa %s739, 1
    %741 = vsyncpa [#allocation4], 1
    %s742 = scalar_lea.sflag [#allocation4], 1
    %743 = vsyncpa %s742, 1
    %744 = vsyncpa [#allocation5], 1
    %s745 = scalar_lea.sflag [#allocation5], 1
    %746 = vsyncpa %s745, 1

</llo_original>
